<compile_context>
chip_gen: v5e
topology: v5e:2x2
jax: 0.10.0
libtpu: 0.0.40
codegen_flags: <defaults>
</compile_context>

<pallas_src>
import functools

import jax
import jax.numpy as jnp
import numpy as np
from jax.experimental import pallas as pl
from jax.experimental.pallas import tpu as pltpu


def _round_up(v, m):
    return ((v + m - 1) // m) * m


# ---------------------------------------------------------------------------
# Kernels
# ---------------------------------------------------------------------------
def _prep_kernel(x_ref, we_ref, be_ref, wb_ref, bb_ref, a_ref, b_ref, u_ref, *, shp):
    """Node encoder + all per-node linear parts of every scale, one fused GEMM.

    a = h @ Wm_i(stacked) + bm(stacked)   (target part of the message, bias folded)
    b = h @ Wm_j(stacked)                  (source part of the message)
    u = h @ Wu_x(stacked) + bu(stacked)    (self part of the update)
    """
    h = jnp.maximum(
        jnp.dot(x_ref[...], we_ref[...], preferred_element_type=jnp.float32)
        + be_ref[...], 0.0)
    big = jnp.dot(h, wb_ref[...], preferred_element_type=jnp.float32) + bb_ref[...]
    # 128-aligned lane slices -> no relayout cost.
    a_ref[...] = big[:, :shp].astype(a_ref.dtype)
    b_ref[...] = big[:, shp:2 * shp].astype(b_ref.dtype)
    u_ref[...] = big[:, 2 * shp:].astype(u_ref.dtype)


def _fused_scales_kernel(pos_t_ref, pos_s_ref, bt_ref, bs_ref,
                         a_ref, b_ref, u1_ref, radl_ref, wmd_ref, wua_ref,
                         o_ref, acc_ref, deg_ref,
                         *, radii, hidden, tm, tn, shp):
    """All RadiusGraphConv scales for one [TM] target tile x one [TN] source chunk.

    pos_t_ref : [TM, 3]   target positions
    pos_s_ref : [3, TN]   source positions (transposed)
    bt_ref    : [TM, 1]   target graph ids (pad nodes = num_graphs)
    bs_ref    : [1, TN]   source graph ids
    a_ref     : [TM, SHP] h_t @ Wm_i + bm    (per-scale blocks along lanes, zero padded)
    b_ref     : [TN, SHP] h_s @ Wm_j
    u1_ref    : [TM, SHP] h_t @ Wu_x + bu
    radl_ref  : [1, SHP]  radius per lane (-1 on padding lanes)
    wmd_ref   : [1, SHP]  distance column of the message Linear (per scale)
    wua_ref   : [SHP,SHP] block-diagonal stacked Wu_a
    o_ref     : [TM, SHP] h_scale for every scale (lane-dense output)
    acc_ref   : [TM, SHP] running message sum   (VMEM scratch)
    deg_ref   : [TM, SHP] running neighbor count (VMEM scratch)
    """
    i = pl.program_id(0)
    k = pl.program_id(1)
    nk = pl.num_programs(1)

    @pl.when(k == 0)
    def _():
        acc_ref[...] = jnp.zeros_like(acc_ref)
        deg_ref[...] = jnp.zeros_like(deg_ref)

    # ---- pairwise distance on the [TM, TN] plane (per-coordinate, matches ref) ----
    pos_t = pos_t_ref[...]                       # [TM, 3]
    pos_s = pos_s_ref[...]                       # [3, TN]
    d2 = jnp.zeros((tm, tn), jnp.float32)
    for c in range(3):
        dc = pos_t[:, c:c + 1] - pos_s[c:c + 1, :]
        d2 = d2 + dc * dc
    dist = jnp.sqrt(d2)                          # [TM, TN]

    # ---- validity: same graph, not the same node (global indices) ----
    row = i * tm + jax.lax.broadcasted_iota(jnp.int32, (tm, tn), 0)
    col = k * tn + jax.lax.broadcasted_iota(jnp.int32, (tm, tn), 1)
    valid = (bt_ref[...] == bs_ref[...]) & (row != col)          # [TM, TN] bool

    # ---- message cube: mask folded into the ReLU (no f32 mask multiply) ----
    a = a_ref[...]
    b = b_ref[...]
    wmd = wmd_ref[...][None]                                     # [1, 1, SHP]
    radl = radl_ref[...][None]                                   # [1, 1, SHP]
    lin = a[:, None, :] + b[None, :, :] + dist[:, :, None] * wmd  # [TM, TN, SHP]
    cond = valid[:, :, None] & (dist[:, :, None] <= radl)
    msg = jnp.where(cond, jnp.maximum(lin, 0.0), 0.0)
    acc_ref[...] += jnp.sum(msg, axis=1)

    # ---- degree from per-scale plane compares (no cube-wide reduction) ----
    validf = jnp.where(valid, 1.0, 0.0)
    lane = jax.lax.broadcasted_iota(jnp.int32, (tm, shp), 1)
    deg_inc = jnp.zeros((tm, shp), jnp.float32)
    for s, r in enumerate(radii):
        cnt = jnp.sum(jnp.where(dist <= r, validf, 0.0), axis=1, keepdims=True)  # [TM,1]
        deg_inc = jnp.where((lane >= s * hidden) & (lane < (s + 1) * hidden), cnt, deg_inc)
    deg_ref[...] += deg_inc

    # ---- finalize: mean aggregation + per-scale update_nn (block-diagonal Wu_a) ----
    @pl.when(k == nk - 1)
    def _():
        aggr = acc_ref[...] / jnp.maximum(deg_ref[...], 1.0)
        o_ref[...] = jnp.maximum(
            u1_ref[...] + jnp.dot(aggr, wua_ref[...], preferred_element_type=jnp.float32),
            0.0).astype(o_ref.dtype)


def _head_kernel(hs_ref, pool_ref, wp_ref, bp_ref, w1_ref, b1_ref, w2_ref, b2_ref,
                 o_ref, acc_ref):
    """Global mean pool (accumulated over node chunks) + pool MLPs + both scorers."""
    k = pl.program_id(0)

    @pl.when(k == 0)
    def _():
        acc_ref[...] = jnp.zeros_like(acc_ref)

    acc_ref[...] += jnp.dot(pool_ref[...], hs_ref[...], preferred_element_type=jnp.float32)

    @pl.when(k == pl.num_programs(0) - 1)
    def _():
        pooled = jnp.maximum(
            jnp.dot(acc_ref[...], wp_ref[...], preferred_element_type=jnp.float32)
            + bp_ref[...], 0.0)                                                   # [G, SHP]
        hid = jnp.maximum(
            jnp.dot(pooled, w1_ref[...], preferred_element_type=jnp.float32)
            + b1_ref[...], 0.0)                                                   # [G, 2H]
        o_ref[...] = (jnp.dot(hid, w2_ref[...], preferred_element_type=jnp.float32)
                      + b2_ref[...]).astype(o_ref.dtype)                          # [G, 2]


# ---------------------------------------------------------------------------
# Wrapper
# ---------------------------------------------------------------------------
def multiscale_discriminator_forward(x, pos, batch, params, num_graphs, num_scales):
    n, in_dim = x.shape
    hidden = params["enc_w"].shape[1]
    sh = num_scales * hidden
    shp = max(128, _round_up(sh, 128))           # lane-dense stacked scale width
    radii = tuple(3.0 * 1.5 ** i for i in range(num_scales))
    scales = params["scales"]

    # Tile sizes: TN=128 (lane constraint on the dist plane); TM=64 keeps the
    # [TM, TN, SHP] f32 message cube at 4 MiB so compiler temporaries stay well
    # under v7x's 64 MiB VMEM.  On v5e/v6e (128 MiB) TM can be swept up to 128-256.
    TN = 128
    TM = 64
    TP = 128
    TH = 128
    n_pad = _round_up(max(n, TN), 128)
    pad_n = n_pad - n

    # ---- stacked / padded per-scale weights (lane axis) ----
    def pad_cols(m, w):
        return jnp.pad(m, ((0, 0), (0, w - m.shape[1])))

    wmi = pad_cols(jnp.concatenate([p["wm_i"] for p in scales], axis=1), shp)
    wmj = pad_cols(jnp.concatenate([p["wm_j"] for p in scales], axis=1), shp)
    wux = pad_cols(jnp.concatenate([p["wu_x"] for p in scales], axis=1), shp)
    bm = pad_cols(jnp.concatenate([p["bm"] for p in scales], axis=1), shp)
    bu = pad_cols(jnp.concatenate([p["bu"] for p in scales], axis=1), shp)
    wmd = pad_cols(jnp.concatenate([p["wm_d"] for p in scales], axis=1), shp)

    wbig = jnp.concatenate([wmi, wmj, wux], axis=1)                          # [H, 3*SHP]
    bbig = jnp.concatenate([bm, jnp.zeros((1, shp), jnp.float32), bu], axis=1)

    wua_bd = jnp.zeros((shp, shp), jnp.float32)
    wp_bd = jnp.zeros((shp, shp), jnp.float32)
    for s in range(num_scales):
        sl = slice(s * hidden, (s + 1) * hidden)
        wua_bd = wua_bd.at[sl, sl].set(scales[s]["wu_a"])
        wp_bd = wp_bd.at[sl, sl].set(scales[s]["wp"])
    bp = pad_cols(jnp.concatenate([p["bp"] for p in scales], axis=1), shp)

    w1 = jnp.pad(jnp.concatenate([params["geo_w1"], params["fn_w1"]], axis=1),
                 ((0, shp - sh), (0, 0)))                                    # [SHP, 2H]
    b1 = jnp.concatenate([params["geo_b1"], params["fn_b1"]], axis=1)        # [1, 2H]
    w2 = jnp.zeros((2 * hidden, 2), jnp.float32)
    w2 = w2.at[:hidden, 0:1].set(params["geo_w2"])
    w2 = w2.at[hidden:, 1:2].set(params["fn_w2"])
    b2 = jnp.concatenate([params["geo_b2"], params["fn_b2"]], axis=1)        # [1, 2]

    # radius per lane (passed as an input -> no captured kernel constants),
    # padding lanes get -1 so they never form edges.
    radl = jnp.asarray(np.concatenate(
        [np.repeat(np.asarray(radii, np.float32), hidden),
         np.full((shp - sh,), -1.0, np.float32)])[None, :])

    # ---- padded node inputs (pad nodes: zero features, graph id = num_graphs) ----
    x_p = jnp.pad(x.astype(jnp.float32), ((0, pad_n), (0, 0)))
    pos_p = jnp.pad(pos.astype(jnp.float32), ((0, pad_n), (0, 0)))
    batch_p = jnp.concatenate([batch.astype(jnp.int32),
                               jnp.full((pad_n,), num_graphs, jnp.int32)])
    pos_sT = pos_p.T                                                         # [3, n_pad]
    bt_in = batch_p[:, None]                                                 # [n_pad, 1]
    bs_in = batch_p[None, :]                                                 # [1, n_pad]

    onehot = (batch_p[None, :] == jnp.arange(num_graphs)[:, None]).astype(jnp.float32)
    pool = onehot / jnp.maximum(jnp.sum(onehot, axis=1, keepdims=True), 1.0)  # [G, n_pad]

    # ---- prep kernel: encoder + per-node linear parts (3 separate outputs) ----
    a_full, b_full, u1_full = pl.pallas_call(
        functools.partial(_prep_kernel, shp=shp),
        out_shape=(jax.ShapeDtypeStruct((n_pad, shp), jnp.float32),) * 3,
        grid=(n_pad // TP,),
        in_specs=[
            pl.BlockSpec((TP, in_dim), lambda p: (p, 0)),
            pl.BlockSpec((in_dim, hidden), lambda p: (0, 0)),
            pl.BlockSpec((1, hidden), lambda p: (0, 0)),
            pl.BlockSpec((hidden, 3 * shp), lambda p: (0, 0)),
            pl.BlockSpec((1, 3 * shp), lambda p: (0, 0)),
        ],
        out_specs=(pl.BlockSpec((TP, shp), lambda p: (p, 0)),) * 3,
        compiler_params=pltpu.CompilerParams(dimension_semantics=("parallel",)),
    )(x_p, params["enc_w"], params["enc_b"], wbig, bbig)

    # ---- fused all-scales GNN kernel: (target tiles) x (source chunks) grid ----
    h_scale = pl.pallas_call(
        functools.partial(_fused_scales_kernel, radii=radii, hidden=hidden,
                          tm=TM, tn=TN, shp=shp),
        out_shape=jax.ShapeDtypeStruct((n_pad, shp), jnp.float32),
        grid=(n_pad // TM, n_pad // TN),
        in_specs=[
            pl.BlockSpec((TM, 3), lambda i, k: (i, 0)),        # target positions
            pl.BlockSpec((3, TN), lambda i, k: (0, k)),        # source positions (T)
            pl.BlockSpec((TM, 1), lambda i, k: (i, 0)),        # target graph ids
            pl.BlockSpec((1, TN), lambda i, k: (0, k)),        # source graph ids
            pl.BlockSpec((TM, shp), lambda i, k: (i, 0)),      # a  = h@Wm_i + bm
            pl.BlockSpec((TN, shp), lambda i, k: (k, 0)),      # b  = h@Wm_j   (chunked)
            pl.BlockSpec((TM, shp), lambda i, k: (i, 0)),      # u1 = h@Wu_x + bu
            pl.BlockSpec((1, shp), lambda i, k: (0, 0)),       # radius per lane
            pl.BlockSpec((1, shp), lambda i, k: (0, 0)),       # wm_d per lane
            pl.BlockSpec((shp, shp), lambda i, k: (0, 0)),     # block-diag Wu_a
        ],
        out_specs=pl.BlockSpec((TM, shp), lambda i, k: (i, 0)),
        scratch_shapes=[pltpu.VMEM((TM, shp), jnp.float32),    # message sum
                        pltpu.VMEM((TM, shp), jnp.float32)],   # degree
        compiler_params=pltpu.CompilerParams(
            dimension_semantics=("parallel", "arbitrary"),
            vmem_limit_bytes=48 * 1024 * 1024),
    )(pos_p, pos_sT, bt_in, bs_in, a_full, b_full, u1_full, radl, wmd, wua_bd)

    # ---- head kernel: pooling (accumulated over node chunks) + MLPs + scorers ----
    out = pl.pallas_call(
        _head_kernel,
        out_shape=jax.ShapeDtypeStruct((num_graphs, 2), jnp.float32),
        grid=(n_pad // TH,),
        in_specs=[
            pl.BlockSpec((TH, shp), lambda k: (k, 0)),
            pl.BlockSpec((num_graphs, TH), lambda k: (0, k)),
            pl.BlockSpec((shp, shp), lambda k: (0, 0)),
            pl.BlockSpec((1, shp), lambda k: (0, 0)),
            pl.BlockSpec((shp, 2 * hidden), lambda k: (0, 0)),
            pl.BlockSpec((1, 2 * hidden), lambda k: (0, 0)),
            pl.BlockSpec((2 * hidden, 2), lambda k: (0, 0)),
            pl.BlockSpec((1, 2), lambda k: (0, 0)),
        ],
        out_specs=pl.BlockSpec((num_graphs, 2), lambda k: (0, 0)),
        scratch_shapes=[pltpu.VMEM((num_graphs, shp), jnp.float32)],
        compiler_params=pltpu.CompilerParams(dimension_semantics=("arbitrary",)),
    )(h_scale, pool, wp_bd, bp, w1, b1, w2, b2)

    return out[:, 0:1], out[:, 1:2]


# ---------------------------------------------------------------------------
# Pure-JAX reference (same dense formulation) for the correctness check
# ---------------------------------------------------------------------------
def reference_forward(x, pos, batch, params, num_graphs, num_scales):
    n = x.shape[0]
    h = jax.nn.relu(x @ params["enc_w"] + params["enc_b"])
    diff = pos[:, None, :] - pos[None, :, :]
    dist = jnp.sqrt(jnp.sum(diff * diff, axis=-1))
    same = batch[:, None] == batch[None, :]
    noself = ~jnp.eye(n, dtype=bool)
    onehot = (batch[None, :] == jnp.arange(num_graphs)[:, None]).astype(jnp.float32)
    pool = onehot / jnp.maximum(onehot.sum(1, keepdims=True), 1.0)
    pooled_feats = []
    for i in range(num_scales):
        r = 3.0 * 1.5 ** i
        p = params["scales"][i]
        adj = (same & noself & (dist <= r)).astype(jnp.float32)
        a = h @ p["wm_i"]
        b = h @ p["wm_j"]
        msg = jax.nn.relu(a[:, None, :] + b[None, :, :]
                          + dist[:, :, None] * p["wm_d"][None] + p["bm"][None])
        msg = msg * adj[:, :, None]
        aggr = msg.sum(1) / jnp.maximum(adj.sum(1, keepdims=True), 1.0)
        h_scale = jax.nn.relu(h @ p["wu_x"] + aggr @ p["wu_a"] + p["bu"])
        pooled_feats.append(jax.nn.relu(pool @ h_scale @ p["wp"] + p["bp"]))
    feats = jnp.concatenate(pooled_feats, 1)
    geom = jax.nn.relu(feats @ params["geo_w1"] + params["geo_b1"]) @ params["geo_w2"] + params["geo_b2"]
    func = jax.nn.relu(feats @ params["fn_w1"] + params["fn_b1"]) @ params["fn_w2"] + params["fn_b2"]
    return geom, func


# ---------------------------------------------------------------------------
# Deterministic parameter init (synthetic; mirrors nn.Module __init__ shapes)
# ---------------------------------------------------------------------------
def init_params(key, input_dim, hidden, num_scales):
    def dense(k, fan_in, fan_out):
        kw, kb = jax.random.split(k)
        std = 1.0 / np.sqrt(fan_in)
        w = jax.random.uniform(kw, (fan_in, fan_out), jnp.float32, -std, std)
        b = jax.random.uniform(kb, (1, fan_out), jnp.float32, -std, std)
        return w, b

    keys = jax.random.split(key, 3 + num_scales)
    enc_w, enc_b = dense(keys[0], input_dim, hidden)

    scales = []
    for i in range(num_scales):
        ks = jax.random.split(keys[3 + i], 3)
        wm, bm = dense(ks[0], 2 * hidden + 1, hidden)   # message_nn: Linear(2H+1, H)
        wu, bu = dense(ks[1], 2 * hidden, hidden)       # update_nn:  Linear(2H, H)
        wp, bp = dense(ks[2], hidden, hidden)           # pool layer
        scales.append(dict(
            wm_i=wm[:hidden, :], wm_j=wm[hidden:2 * hidden, :],
            wm_d=wm[2 * hidden:2 * hidden + 1, :], bm=bm,
            wu_x=wu[:hidden, :], wu_a=wu[hidden:, :], bu=bu,
            wp=wp, bp=bp))

    k_geo = jax.random.split(keys[1], 2)
    k_fn = jax.random.split(keys[2], 2)
    geo_w1, geo_b1 = dense(k_geo[0], hidden * num_scales, hidden)
    geo_w2, geo_b2 = dense(k_geo[1], hidden, 1)
    fn_w1, fn_b1 = dense(k_fn[0], hidden * num_scales, hidden)
    fn_w2, fn_b2 = dense(k_fn[1], hidden, 1)

    return dict(enc_w=enc_w, enc_b=enc_b, scales=scales,
                geo_w1=geo_w1, geo_b1=geo_b1, geo_w2=geo_w2, geo_b2=geo_b2,
                fn_w1=fn_w1, fn_b1=fn_b1, fn_w2=fn_w2, fn_b2=fn_b2)


if __name__ == "__main__":
    INPUT_DIM = 8
    HIDDEN = 32
    NUM_SCALES = 3
    NUM_NODES = 200     # pads to 256 -> fused grid (4, 2); prep/head grids of 2
    NUM_GRAPHS = 2

    key = jax.random.PRNGKey(0)
    kx, kp, kparam = jax.random.split(key, 3)

    x = jax.random.normal(kx, (NUM_NODES, INPUT_DIM), jnp.float32)
    pos = 2.0 * jax.random.normal(kp, (NUM_NODES, 3), jnp.float32)
    batch = jnp.concatenate([jnp.zeros(NUM_NODES // 2, jnp.int32),
                             jnp.ones(NUM_NODES - NUM_NODES // 2, jnp.int32)])

    params = init_params(kparam, INPUT_DIM, HIDDEN, NUM_SCALES)

    geom, func = multiscale_discriminator_forward(
        x, pos, batch, params, NUM_GRAPHS, NUM_SCALES)
    jax.block_until_ready((geom, func))

    geom_ref, func_ref = reference_forward(x, pos, batch, params, NUM_GRAPHS, NUM_SCALES)
    np.testing.assert_allclose(np.asarray(geom), np.asarray(geom_ref), atol=2e-3, rtol=2e-3)
    np.testing.assert_allclose(np.asarray(func), np.asarray(func_ref), atol=2e-3, rtol=2e-3)
    assert geom.shape == (NUM_GRAPHS, 1) and func.shape == (NUM_GRAPHS, 1)

    print("KERNEL_OK")
</pallas_src>

<mosaic_0001>
module attributes {stable_mosaic.version = 11 : i64} {
  func.func @_prep_kernel(%arg0: i32, %arg1: memref<128x8xf32, #tpu.memory_space<vmem>>, %arg2: memref<8x32xf32, #tpu.memory_space<vmem>>, %arg3: memref<1x32xf32, #tpu.memory_space<vmem>>, %arg4: memref<32x384xf32, #tpu.memory_space<vmem>>, %arg5: memref<1x384xf32, #tpu.memory_space<vmem>>, %arg6: memref<128x128xf32, #tpu.memory_space<vmem>>, %arg7: memref<128x128xf32, #tpu.memory_space<vmem>>, %arg8: memref<128x128xf32, #tpu.memory_space<vmem>>) attributes {dimension_semantics = [#tpu.dimension_semantics<parallel>], iteration_bounds = array<i64: 2>, scalar_prefetch = 0 : i64, scratch_operands = 0 : i64, tpu.core_type = #tpu.core_type<tc>, window_params = [{transform_indices = @transform_0, window_bounds = array<i64: 128, 8>}, {pipeline_mode = #tpu.pipeline_mode<synchronous>, transform_indices = @transform_1, window_bounds = array<i64: 8, 32>}, {pipeline_mode = #tpu.pipeline_mode<synchronous>, transform_indices = @transform_2, window_bounds = array<i64: 1, 32>}, {pipeline_mode = #tpu.pipeline_mode<synchronous>, transform_indices = @transform_3, window_bounds = array<i64: 32, 384>}, {pipeline_mode = #tpu.pipeline_mode<synchronous>, transform_indices = @transform_4, window_bounds = array<i64: 1, 384>}, {transform_indices = @transform_5, window_bounds = array<i64: 128, 128>}, {transform_indices = @transform_6, window_bounds = array<i64: 128, 128>}, {transform_indices = @transform_7, window_bounds = array<i64: 128, 128>}]} {
    %c0 = arith.constant 0 : index
    %c0_0 = arith.constant 0 : index
    %0 = vector.load %arg1[%c0, %c0_0] : memref<128x8xf32, #tpu.memory_space<vmem>>, vector<128x8xf32>
    %c0_1 = arith.constant 0 : index
    %c0_2 = arith.constant 0 : index
    %1 = vector.load %arg2[%c0_1, %c0_2] : memref<8x32xf32, #tpu.memory_space<vmem>>, vector<8x32xf32>
    %cst = arith.constant dense<0.000000e+00> : vector<128x32xf32>
    %2 = tpu.matmul %0, %1, %cst {dimension_numbers = #tpu.dot_dimension_numbers<[1], [0], [0], [1], [0, 0, 1, 1], [], []>} : vector<128x8xf32>, vector<8x32xf32>, vector<128x32xf32> -> vector<128x32xf32>
    %c0_3 = arith.constant 0 : index
    %c0_4 = arith.constant 0 : index
    %3 = vector.load %arg3[%c0_3, %c0_4] : memref<1x32xf32, #tpu.memory_space<vmem>>, vector<1x32xf32>
    %4 = vector.broadcast %3 : vector<1x32xf32> to vector<128x32xf32>
    %5 = arith.addf %2, %4 : vector<128x32xf32>
    %cst_5 = arith.constant 0.000000e+00 : f32
    %6 = vector.broadcast %cst_5 : f32 to vector<128x32xf32>
    %7 = arith.maximumf %5, %6 : vector<128x32xf32>
    %c0_6 = arith.constant 0 : index
    %c0_7 = arith.constant 0 : index
    %8 = vector.load %arg4[%c0_6, %c0_7] : memref<32x384xf32, #tpu.memory_space<vmem>>, vector<32x384xf32>
    %cst_8 = arith.constant dense<0.000000e+00> : vector<128x384xf32>
    %9 = tpu.matmul %7, %8, %cst_8 {dimension_numbers = #tpu.dot_dimension_numbers<[1], [0], [0], [1], [0, 0, 1, 1], [], []>} : vector<128x32xf32>, vector<32x384xf32>, vector<128x384xf32> -> vector<128x384xf32>
    %c0_9 = arith.constant 0 : index
    %c0_10 = arith.constant 0 : index
    %10 = vector.load %arg5[%c0_9, %c0_10] : memref<1x384xf32, #tpu.memory_space<vmem>>, vector<1x384xf32>
    %11 = vector.broadcast %10 : vector<1x384xf32> to vector<128x384xf32>
    %12 = arith.addf %9, %11 : vector<128x384xf32>
    %13 = vector.extract_strided_slice %12 {offsets = [0, 0], sizes = [128, 128], strides = [1, 1]} : vector<128x384xf32> to vector<128x128xf32>
    %c0_11 = arith.constant 0 : index
    %c0_12 = arith.constant 0 : index
    %14 = vector.load %arg6[%c0_11, %c0_12] : memref<128x128xf32, #tpu.memory_space<vmem>>, vector<128x128xf32>
    tpu.vector_store %arg6[%c0_11, %c0_12], %13 {strides = array<i32>} : memref<128x128xf32, #tpu.memory_space<vmem>>, vector<128x128xf32>,
    %15 = vector.extract_strided_slice %12 {offsets = [0, 128], sizes = [128, 128], strides = [1, 1]} : vector<128x384xf32> to vector<128x128xf32>
    %c0_13 = arith.constant 0 : index
    %c0_14 = arith.constant 0 : index
    %16 = vector.load %arg7[%c0_13, %c0_14] : memref<128x128xf32, #tpu.memory_space<vmem>>, vector<128x128xf32>
    tpu.vector_store %arg7[%c0_13, %c0_14], %15 {strides = array<i32>} : memref<128x128xf32, #tpu.memory_space<vmem>>, vector<128x128xf32>,
    %17 = vector.extract_strided_slice %12 {offsets = [0, 256], sizes = [128, 128], strides = [1, 1]} : vector<128x384xf32> to vector<128x128xf32>
    %c0_15 = arith.constant 0 : index
    %c0_16 = arith.constant 0 : index
    %18 = vector.load %arg8[%c0_15, %c0_16] : memref<128x128xf32, #tpu.memory_space<vmem>>, vector<128x128xf32>
    tpu.vector_store %arg8[%c0_15, %c0_16], %17 {strides = array<i32>} : memref<128x128xf32, #tpu.memory_space<vmem>>, vector<128x128xf32>,
    return
  }
  func.func @transform_0(%arg0: i32) -> (i32, i32) {
    %c0_i32 = arith.constant 0 : i32
    %c0_i32_0 = arith.constant 0 : i32
    return %arg0, %c0_i32 : i32, i32
  }
  func.func @transform_1(%arg0: i32) -> (i32, i32) {
    %c0_i32 = arith.constant 0 : i32
    %c0_i32_0 = arith.constant 0 : i32
    %c0_i32_1 = arith.constant 0 : i32
    return %c0_i32, %c0_i32_0 : i32, i32
  }
  func.func @transform_2(%arg0: i32) -> (i32, i32) {
    %c0_i32 = arith.constant 0 : i32
    %c0_i32_0 = arith.constant 0 : i32
    %c0_i32_1 = arith.constant 0 : i32
    return %c0_i32, %c0_i32_0 : i32, i32
  }
  func.func @transform_3(%arg0: i32) -> (i32, i32) {
    %c0_i32 = arith.constant 0 : i32
    %c0_i32_0 = arith.constant 0 : i32
    %c0_i32_1 = arith.constant 0 : i32
    return %c0_i32, %c0_i32_0 : i32, i32
  }
  func.func @transform_4(%arg0: i32) -> (i32, i32) {
    %c0_i32 = arith.constant 0 : i32
    %c0_i32_0 = arith.constant 0 : i32
    %c0_i32_1 = arith.constant 0 : i32
    return %c0_i32, %c0_i32_0 : i32, i32
  }
  func.func @transform_5(%arg0: i32) -> (i32, i32) {
    %c0_i32 = arith.constant 0 : i32
    %c0_i32_0 = arith.constant 0 : i32
    return %arg0, %c0_i32 : i32, i32
  }
  func.func @transform_6(%arg0: i32) -> (i32, i32) {
    %c0_i32 = arith.constant 0 : i32
    %c0_i32_0 = arith.constant 0 : i32
    return %arg0, %c0_i32 : i32, i32
  }
  func.func @transform_7(%arg0: i32) -> (i32, i32) {
    %c0_i32 = arith.constant 0 : i32
    %c0_i32_0 = arith.constant 0 : i32
    return %arg0, %c0_i32 : i32, i32
  }
}

</mosaic_0001>

<llo_original>
// kernel: tpu_custom_call.1
$region0: #{tpu_custom_call.1}
  #allocation0 [shape = 'u32[]', space=smem, size = 0x4, offset = 0x4, fixed_abs, tag = 'smem constant byte address 0x4 - core index']
  #allocation1 [shape = 'u32[72,128]{1,0:T(1,128)}', space=vmem, size = 0x9000, scoped, tag = 'internal scratch']
  %s0 = inlined_call_operand.vmem [shape: f32[256,8], index: 0, kind: input, shape index: {}]
  %s1 = inlined_call_operand.vmem [shape: f32[8,32], index: 1, kind: input, shape index: {}]
  %s2 = inlined_call_operand.vmem [shape: f32[1,32], index: 2, kind: input, shape index: {}]
  %s3 = inlined_call_operand.vmem [shape: f32[32,384], index: 3, kind: input, shape index: {}]
  %s4 = inlined_call_operand.vmem [shape: f32[1,384], index: 4, kind: input, shape index: {}]
  %s5 = inlined_call_operand.hbm [shape: f32[256,128], index: 5, kind: output, shape index: {0}]
  %s6 = inlined_call_operand.hbm [shape: f32[256,128], index: 6, kind: output, shape index: {1}]
  %s7 = inlined_call_operand.hbm [shape: f32[256,128], index: 7, kind: output, shape index: {2}]
  %8 = xla_tuple %s5, %s6, %s7
  %s9 = sld [smem:[#allocation0]]
  $region69: #{tpu_custom_call.1} parent=0
    _
  %s11 = ssub.s32 1, %s9
  %s12 = scalar_select 0, %s11, %s9
  $region1: #{tpu_custom_call.1} parent=0
    #allocation2 [shape = 'u8[131072]{0}', space=vmem, size = 0x20000, scoped, tag = 'output window, operand 0']
    #allocation3 [shape = 's32[2]{0}', space=sflag, size = 0x8, scoped, tag = 'scoped memory for tpu_custom_call.1']
    #allocation4 [shape = 'u8[131072]{0}', space=vmem, size = 0x20000, scoped, tag = 'output window, operand 1']
    #allocation5 [shape = 's32[2]{0}', space=sflag, size = 0x8, scoped, tag = 'scoped memory for tpu_custom_call.1']
    #allocation6 [shape = 'u8[131072]{0}', space=vmem, size = 0x20000, scoped, tag = 'output window, operand 2']
    %13 = vsyncpa [#allocation3], 0
    %s14 = scalar_lea.sflag [#allocation3], 1
    %15 = vsyncpa %s14, 0
    %16 = vsyncpa [#allocation5], 0
    %s17 = scalar_lea.sflag [#allocation5], 1
    %18 = vsyncpa %s17, 0
    loop: start=0, step=1, limit=4
    $region2: #{tpu_custom_call.1} parent=1 // loop_pre_header
      _
    $region3: #{tpu_custom_call.1} parent=1 // loop_header
      %s20 = sphi 0, %s24
      %p21 = scmp.ge.s32.totalorder %s20, 4
      %s30 = sphi 0, %s32
      %s33 = sphi 0, %s30
      %s34 = sphi 0, %s33
      %s50 = sphi 0, %s34
      %s54 = sphi 0, %s54
      %s56 = sphi 0, %s54
      %s57 = sphi 0, %s56
      %s71 = sphi 0, %s57
      %s75 = sphi 0, %s75
      %s77 = sphi 0, %s75
      %s78 = sphi 0, %s77
      %s92 = sphi 0, %s78
      %s96 = sphi 0, %s96
      %s98 = sphi 0, %s96
      %s99 = sphi 0, %s98
      %s113 = sphi 0, %s99
      %s117 = sphi 0, %s117
      %s119 = sphi 0, %s117
      %s120 = sphi 0, %s119
      %s134 = sphi 0, %s120
      %s140 = sphi 0, %s142
      %s143 = sphi 0, %s140
      %s144 = sphi 0, %s143
      %s160 = sphi 0, %s144
      %s166 = sphi 0, %s168
      %s169 = sphi 0, %s166
      %s170 = sphi 0, %s169
      %s186 = sphi 0, %s170
      %s192 = sphi 0, %s194
      %s195 = sphi 0, %s192
      %s196 = sphi 0, %s195
      %s212 = sphi 0, %s196
    $region4: #{tpu_custom_call.1} parent=1 // loop_header_branch
      %23 = sbr.rel (%p21) target = $region8
    $region5: #{tpu_custom_call.1} parent=1 // loop_body
      %s25 = ssub.s32 %s20, 1
      %s26 = ssub.s32 %s20, 2
      %s27 = sadd.s32 %s20, 1
      %s28 = ssub.s32 %s20, %s27
      %p29 = scmp.eq.s32.totalorder %s28, 0
      %s31 = sadd.s32 %s30, 1
      %s32 = scalar_select %p29, %s30, %s31
      %p35 = pneg %p29
      %p36 = scmp.eq.s32.totalorder %s20, 1
      %p37 = por %p35, %p36
      %p38 = scmp.ne.s32.totalorder %s30, %s33
      %p39 = scmp.eq.s32.totalorder %s20, 0
      %p40 = por %p38, %p39
      %p41 = scmp.ne.s32.totalorder %s30, %s33
      %p42 = scmp.eq.s32.totalorder %s25, 1
      %p43 = por %p41, %p42
      %p44 = scmp.ne.s32.totalorder %s33, %s34
      %p45 = scmp.eq.s32.totalorder %s25, 0
      %p46 = por %p44, %p45
      %p47 = scmp.ne.s32.totalorder %s33, %s34
      %p48 = scmp.eq.s32.totalorder %s26, 1
      %p49 = por %p47, %p48
      %p51 = scmp.ne.s32.totalorder %s34, %s50
      %p52 = scmp.eq.s32.totalorder %s26, 0
      %p53 = por %p51, %p52
      %s55 = sadd.s32 %s54, 1
      %p58 = scmp.eq.s32.totalorder %s20, 1
      %p59 = scmp.ne.s32.totalorder %s54, %s56
      %p60 = scmp.eq.s32.totalorder %s20, 0
      %p61 = por %p59, %p60
      %p62 = scmp.ne.s32.totalorder %s54, %s56
      %p63 = scmp.eq.s32.totalorder %s25, 1
      %p64 = por %p62, %p63
      %p65 = scmp.ne.s32.totalorder %s56, %s57
      %p66 = scmp.eq.s32.totalorder %s25, 0
      %p67 = por %p65, %p66
      %p68 = scmp.ne.s32.totalorder %s56, %s57
      %p69 = scmp.eq.s32.totalorder %s26, 1
      %p70 = por %p68, %p69
      %p72 = scmp.ne.s32.totalorder %s57, %s71
      %p73 = scmp.eq.s32.totalorder %s26, 0
      %p74 = por %p72, %p73
      %s76 = sadd.s32 %s75, 1
      %p79 = scmp.eq.s32.totalorder %s20, 1
      %p80 = scmp.ne.s32.totalorder %s75, %s77
      %p81 = scmp.eq.s32.totalorder %s20, 0
      %p82 = por %p80, %p81
      %p83 = scmp.ne.s32.totalorder %s75, %s77
      %p84 = scmp.eq.s32.totalorder %s25, 1
      %p85 = por %p83, %p84
      %p86 = scmp.ne.s32.totalorder %s77, %s78
      %p87 = scmp.eq.s32.totalorder %s25, 0
      %p88 = por %p86, %p87
      %p89 = scmp.ne.s32.totalorder %s77, %s78
      %p90 = scmp.eq.s32.totalorder %s26, 1
      %p91 = por %p89, %p90
      %p93 = scmp.ne.s32.totalorder %s78, %s92
      %p94 = scmp.eq.s32.totalorder %s26, 0
      %p95 = por %p93, %p94
      %s97 = sadd.s32 %s96, 1
      %p100 = scmp.eq.s32.totalorder %s20, 1
      %p101 = scmp.ne.s32.totalorder %s96, %s98
      %p102 = scmp.eq.s32.totalorder %s20, 0
      %p103 = por %p101, %p102
      %p104 = scmp.ne.s32.totalorder %s96, %s98
      %p105 = scmp.eq.s32.totalorder %s25, 1
      %p106 = por %p104, %p105
      %p107 = scmp.ne.s32.totalorder %s98, %s99
      %p108 = scmp.eq.s32.totalorder %s25, 0
      %p109 = por %p107, %p108
      %p110 = scmp.ne.s32.totalorder %s98, %s99
      %p111 = scmp.eq.s32.totalorder %s26, 1
      %p112 = por %p110, %p111
      %p114 = scmp.ne.s32.totalorder %s99, %s113
      %p115 = scmp.eq.s32.totalorder %s26, 0
      %p116 = por %p114, %p115
      %s118 = sadd.s32 %s117, 1
      %p121 = scmp.eq.s32.totalorder %s20, 1
      %p122 = scmp.ne.s32.totalorder %s117, %s119
      %p123 = scmp.eq.s32.totalorder %s20, 0
      %p124 = por %p122, %p123
      %p125 = scmp.ne.s32.totalorder %s117, %s119
      %p126 = scmp.eq.s32.totalorder %s25, 1
      %p127 = por %p125, %p126
      %p128 = scmp.ne.s32.totalorder %s119, %s120
      %p129 = scmp.eq.s32.totalorder %s25, 0
      %p130 = por %p128, %p129
      %p131 = scmp.ne.s32.totalorder %s119, %s120
      %p132 = scmp.eq.s32.totalorder %s26, 1
      %p133 = por %p131, %p132
      %p135 = scmp.ne.s32.totalorder %s120, %s134
      %p136 = scmp.eq.s32.totalorder %s26, 0
      %p137 = por %p135, %p136
      %s138 = ssub.s32 %s20, %s27
      %p139 = scmp.eq.s32.totalorder %s138, 0
      %s141 = sadd.s32 %s140, 1
      %s142 = scalar_select %p139, %s140, %s141
      %p145 = pneg %p139
      %p146 = scmp.eq.s32.totalorder %s20, 1
      %p147 = por %p145, %p146
      %p148 = scmp.ne.s32.totalorder %s140, %s143
      %p149 = scmp.eq.s32.totalorder %s20, 0
      %p150 = por %p148, %p149
      %p151 = scmp.ne.s32.totalorder %s140, %s143
      %p152 = scmp.eq.s32.totalorder %s25, 1
      %p153 = por %p151, %p152
      %p154 = scmp.ne.s32.totalorder %s143, %s144
      %p155 = scmp.eq.s32.totalorder %s25, 0
      %p156 = por %p154, %p155
      %p157 = scmp.ne.s32.totalorder %s143, %s144
      %p158 = scmp.eq.s32.totalorder %s26, 1
      %p159 = por %p157, %p158
      %p161 = scmp.ne.s32.totalorder %s144, %s160
      %p162 = scmp.eq.s32.totalorder %s26, 0
      %p163 = por %p161, %p162
      %s164 = ssub.s32 %s20, %s27
      %p165 = scmp.eq.s32.totalorder %s164, 0
      %s167 = sadd.s32 %s166, 1
      %s168 = scalar_select %p165, %s166, %s167
      %p171 = pneg %p165
      %p172 = scmp.eq.s32.totalorder %s20, 1
      %p173 = por %p171, %p172
      %p174 = scmp.ne.s32.totalorder %s166, %s169
      %p175 = scmp.eq.s32.totalorder %s20, 0
      %p176 = por %p174, %p175
      %p177 = scmp.ne.s32.totalorder %s166, %s169
      %p178 = scmp.eq.s32.totalorder %s25, 1
      %p179 = por %p177, %p178
      %p180 = scmp.ne.s32.totalorder %s169, %s170
      %p181 = scmp.eq.s32.totalorder %s25, 0
      %p182 = por %p180, %p181
      %p183 = scmp.ne.s32.totalorder %s169, %s170
      %p184 = scmp.eq.s32.totalorder %s26, 1
      %p185 = por %p183, %p184
      %p187 = scmp.ne.s32.totalorder %s170, %s186
      %p188 = scmp.eq.s32.totalorder %s26, 0
      %p189 = por %p187, %p188
      %s190 = ssub.s32 %s20, %s27
      %p191 = scmp.eq.s32.totalorder %s190, 0
      %s193 = sadd.s32 %s192, 1
      %s194 = scalar_select %p191, %s192, %s193
      %p197 = pneg %p191
      %p198 = scmp.eq.s32.totalorder %s20, 1
      %p199 = por %p197, %p198
      %p200 = scmp.ne.s32.totalorder %s192, %s195
      %p201 = scmp.eq.s32.totalorder %s20, 0
      %p202 = por %p200, %p201
      %p203 = scmp.ne.s32.totalorder %s192, %s195
      %p204 = scmp.eq.s32.totalorder %s25, 1
      %p205 = por %p203, %p204
      %p206 = scmp.ne.s32.totalorder %s195, %s196
      %p207 = scmp.eq.s32.totalorder %s25, 0
      %p208 = por %p206, %p207
      %p209 = scmp.ne.s32.totalorder %s195, %s196
      %p210 = scmp.eq.s32.totalorder %s26, 1
      %p211 = por %p209, %p210
      %p213 = scmp.ne.s32.totalorder %s196, %s212
      %p214 = scmp.eq.s32.totalorder %s26, 0
      %p215 = por %p213, %p214
      %p216 = scmp.le.s32.totalorder 1, %s20
      %p217 = scmp.lt.s32.totalorder %s20, 3
      %p218 = pnand %p216, %p217
      %p219 = pneg %p218
      // Predicated region
      $region9: #{tpu_custom_call.1} parent=5 // pred_check
        _
      $region10: #{tpu_custom_call.1} parent=5 // pred_check_branch
        %221 = sbr.rel (%p218) target = $region12
      $region11: #{tpu_custom_call.1} parent=5 // pred_region
        %s222 = ssub.s32 %s20, 1
        // Predicated region
        $region13: #{tpu_custom_call.1} parent=11 // pred_check
          %p223 = pneg %p67
        $region14: #{tpu_custom_call.1} parent=11 // pred_check_branch
          %225 = sbr.rel (%p223) target = $region16
        $region15: #{tpu_custom_call.1} parent=11 // pred_region
          _
        $region16: #{tpu_custom_call.1} parent=11 // pred_fallthru
          _
        // Predicated region
        $region17: #{tpu_custom_call.1} parent=11 // pred_check
          %p226 = pneg %p88
        $region18: #{tpu_custom_call.1} parent=11 // pred_check_branch
          %228 = sbr.rel (%p226) target = $region20
        $region19: #{tpu_custom_call.1} parent=11 // pred_region
          _
        $region20: #{tpu_custom_call.1} parent=11 // pred_fallthru
          _
        // Predicated region
        $region21: #{tpu_custom_call.1} parent=11 // pred_check
          %p229 = pneg %p109
        $region22: #{tpu_custom_call.1} parent=11 // pred_check_branch
          %231 = sbr.rel (%p229) target = $region24
        $region23: #{tpu_custom_call.1} parent=11 // pred_region
          _
        $region24: #{tpu_custom_call.1} parent=11 // pred_fallthru
          _
        // Predicated region
        $region25: #{tpu_custom_call.1} parent=11 // pred_check
          %p232 = pneg %p130
        $region26: #{tpu_custom_call.1} parent=11 // pred_check_branch
          %234 = sbr.rel (%p232) target = $region28
        $region27: #{tpu_custom_call.1} parent=11 // pred_region
          _
        $region28: #{tpu_custom_call.1} parent=11 // pred_fallthru
          _
      $region12: #{tpu_custom_call.1} parent=5 // pred_fallthru
        _
      %p235 = scmp.lt.s32.totalorder %s20, 2
      // Predicated region
      $region29: #{tpu_custom_call.1} parent=5 // pred_check
        %p236 = pneg %p235
      $region30: #{tpu_custom_call.1} parent=5 // pred_check_branch
        %238 = sbr.rel (%p236) target = $region32
      $region31: #{tpu_custom_call.1} parent=5 // pred_region
        // Predicated region
        $region33: #{tpu_custom_call.1} parent=31 // pred_check
          %p239 = pneg %p40
        $region34: #{tpu_custom_call.1} parent=31 // pred_check_branch
          %241 = sbr.rel (%p239) target = $region36
        $region35: #{tpu_custom_call.1} parent=31 // pred_region
          %s242 = smul.u32 16, %s20
          %p243 = scmp.lt.s32.totalorder %s242, 31
          %s244 = scalar_select %p243, %s242, 31
          %s245 = smul.addr %s244, 8
          %s246 = scalar_lea.vmem %s0, %s245
          %s247 = smul.u32 16, %s20
        $region36: #{tpu_custom_call.1} parent=31 // pred_fallthru
          _
      $region32: #{tpu_custom_call.1} parent=5 // pred_fallthru
        _
      %p248 = scmp.le.s32.totalorder 1, %s20
      %p249 = scmp.lt.s32.totalorder %s20, 3
      %p250 = pnand %p248, %p249
      %p251 = pneg %p250
      // Predicated region
      $region37: #{tpu_custom_call.1} parent=5 // pred_check
        _
      $region38: #{tpu_custom_call.1} parent=5 // pred_check_branch
        %253 = sbr.rel (%p250) target = $region40
      $region39: #{tpu_custom_call.1} parent=5 // pred_region
        %s254 = ssub.s32 %s20, 1
        %s255 = smul.u32 16, %s25
        %p256 = scmp.lt.s32.totalorder %s255, 31
        %s257 = scalar_select %p256, %s255, 31
        %s258 = smul.addr %s257, 8
        %s259 = scalar_lea.vmem %s0, %s258
        %p260 = pneg %p46
        %p261 = pneg %p43
        %p262 = pneg %p67
        %p263 = pneg %p64
        %p264 = pneg %p88
        %p265 = pneg %p85
        %p266 = pneg %p109
        %p267 = pneg %p106
        %p268 = pneg %p130
        %p269 = pneg %p127
        %p270 = pneg %p156
        %p271 = pneg %p153
        %s272 = sand.u32 %s143, 1
        %s273 = scalar_lea.sflag [#allocation3], %s272
        %s274 = sand.u32 %s143, 1
        %s275 = smul.addr %s274, 128
        %s276 = scalar_lea.vmem [#allocation2], %s275
        %p277 = pneg %p182
        %p278 = pneg %p179
        %s279 = sand.u32 %s25, 1
        %s280 = scalar_lea.sflag [#allocation5], %s279
        %s281 = sand.u32 %s169, 1
        %s282 = smul.addr %s281, 128
        %s283 = scalar_lea.vmem [#allocation4], %s282
        %p284 = pneg %p208
        %p285 = pneg %p205
        %s286 = sand.u32 %s25, 1
        %s287 = scalar_lea.sflag [#allocation5], %s286
        %s288 = sand.u32 %s195, 1
        %s289 = smul.addr %s288, 128
        %s290 = scalar_lea.vmem [#allocation6], %s289
        %s291 = smul.u32 16, %s25
        %p292 = scmp.lt.s32.totalorder %s291, 31
        %s293 = scalar_select %p292, %s291, 31
        %s294 = smul.addr %s293, 8
        %s295 = scalar_lea.vmem %s0, %s294
        %s296 = smul.u32 16, %s25
        %s297 = smul.u32 16, %s25
        %s298 = smul.u32 16, %s25
        %s299 = smul.u32 16, %s25
        %v300 = vld [vmem:[%s295] sm:$0xff]
        %v301 = vld [vmem:[%s295 + $0x8] sm:$0xff]
        %v302 = vld [vmem:[%s295 + $0x10] sm:$0xff]
        %v303 = vld [vmem:[%s295 + $0x18] sm:$0xff]
        %v304 = vld [vmem:[%s295 + $0x20] sm:$0xff]
        %v305 = vld [vmem:[%s295 + $0x28] sm:$0xff]
        %v306 = vld [vmem:[%s295 + $0x30] sm:$0xff]
        %v307 = vld [vmem:[%s295 + $0x38] sm:$0xff]
        %v308 = vld [vmem:[%s295 + $0x40] sm:$0xff]
        %v309 = vld [vmem:[%s295 + $0x48] sm:$0xff]
        %v310 = vld [vmem:[%s295 + $0x50] sm:$0xff]
        %v311 = vld [vmem:[%s295 + $0x58] sm:$0xff]
        %v312 = vld [vmem:[%s295 + $0x60] sm:$0xff]
        %v313 = vld [vmem:[%s295 + $0x68] sm:$0xff]
        %v314 = vld [vmem:[%s295 + $0x70] sm:$0xff]
        %v315 = vld [vmem:[%s295 + $0x78] sm:$0xff]
        %v316 = vld [vmem:[%s1] sm:$0xff]
        %v317 = vld [vmem:[%s2] sm:$0x1]
        %v319 = vperm.slane %v317, 0
        %vm321 = vcmask 64512
        %v323 = vsel %vm321, %v300, 0
        %v326 = vsel %vm321, %v301, 0
        %v329 = vsel %vm321, %v302, 0
        %v332 = vsel %vm321, %v303, 0
        %v335 = vsel %vm321, %v304, 0
        %v338 = vsel %vm321, %v305, 0
        %v341 = vsel %vm321, %v306, 0
        %v344 = vsel %vm321, %v307, 0
        %v347 = vsel %vm321, %v308, 0
        %v350 = vsel %vm321, %v309, 0
        %v353 = vsel %vm321, %v310, 0
        %v356 = vsel %vm321, %v311, 0
        %v359 = vsel %vm321, %v312, 0
        %v362 = vsel %vm321, %v313, 0
        %v365 = vsel %vm321, %v314, 0
        %v368 = vsel %vm321, %v315, 0
        %370 = vmatpush.msra.mxu0 0.0
        %371 = vmatpush.msra.mxu0 0.0
        %372 = vmatpush.msra.mxu0 0.0
        %373 = vmatpush.msra.mxu0 0.0
        %374 = vmatpush.msra.mxu0 0.0
        %375 = vmatpush.msra.mxu0 0.0
        %376 = vmatpush.msra.mxu0 0.0
        %377 = vmatpush.msra.mxu0 0.0
        %378 = vmatpush.msra.mxu0 0.0
        %379 = vmatpush.msra.mxu0 0.0
        %380 = vmatpush.msra.mxu0 0.0
        %381 = vmatpush.msra.mxu0 0.0
        %382 = vmatpush.msra.mxu0 0.0
        %383 = vmatpush.msra.mxu0 0.0
        %384 = vmatpush.msra.mxu0 0.0
        %385 = vmatpush.msra.mxu0 %v316
        %386 = vmatmul.f32.gmra.mxu0 %v323
        %v387 = vpop.f32.mrf.mxu0
        %v388 = vadd.f32 %v319, %v387
        %389 = vmatmul.f32.gmra.mxu0 %v326
        %v390 = vpop.f32.mrf.mxu0
        %v391 = vadd.f32 %v319, %v390
        %392 = vmatmul.f32.gmra.mxu0 %v329
        %v393 = vpop.f32.mrf.mxu0
        %v394 = vadd.f32 %v319, %v393
        %395 = vmatmul.f32.gmra.mxu0 %v332
        %v396 = vpop.f32.mrf.mxu0
        %v397 = vadd.f32 %v319, %v396
        %398 = vmatmul.f32.gmra.mxu0 %v335
        %v399 = vpop.f32.mrf.mxu0
        %v400 = vadd.f32 %v319, %v399
        %401 = vmatmul.f32.gmra.mxu0 %v338
        %v402 = vpop.f32.mrf.mxu0
        %v403 = vadd.f32 %v319, %v402
        %404 = vmatmul.f32.gmra.mxu0 %v341
        %v405 = vpop.f32.mrf.mxu0
        %v406 = vadd.f32 %v319, %v405
        %407 = vmatmul.f32.gmra.mxu0 %v344
        %v408 = vpop.f32.mrf.mxu0
        %v409 = vadd.f32 %v319, %v408
        %410 = vmatmul.f32.gmra.mxu0 %v347
        %v411 = vpop.f32.mrf.mxu0
        %v412 = vadd.f32 %v319, %v411
        %413 = vmatmul.f32.gmra.mxu0 %v350
        %v414 = vpop.f32.mrf.mxu0
        %v415 = vadd.f32 %v319, %v414
        %416 = vmatmul.f32.gmra.mxu0 %v353
        %v417 = vpop.f32.mrf.mxu0
        %v418 = vadd.f32 %v319, %v417
        %419 = vmatmul.f32.gmra.mxu0 %v356
        %v420 = vpop.f32.mrf.mxu0
        %v421 = vadd.f32 %v319, %v420
        %422 = vmatmul.f32.gmra.mxu0 %v359
        %v423 = vpop.f32.mrf.mxu0
        %v424 = vadd.f32 %v319, %v423
        %425 = vmatmul.f32.gmra.mxu0 %v362
        %v426 = vpop.f32.mrf.mxu0
        %v427 = vadd.f32 %v319, %v426
        %428 = vmatmul.f32.gmra.mxu0 %v365
        %v429 = vpop.f32.mrf.mxu0
        %v430 = vadd.f32 %v319, %v429
        %431 = vmatmul.f32.gmra.mxu0 %v368
        %v432 = vpop.f32.mrf.mxu0
        %v433 = vadd.f32 %v319, %v432
        %434 = vdwg.mxu0
        %v435 = vmax.f32 %v388, 0.0
        %v436 = vmax.f32 %v391, 0.0
        %v437 = vmax.f32 %v394, 0.0
        %v438 = vmax.f32 %v397, 0.0
        %v439 = vmax.f32 %v400, 0.0
        %v440 = vmax.f32 %v403, 0.0
        %v441 = vmax.f32 %v406, 0.0
        %v442 = vmax.f32 %v409, 0.0
        %v443 = vmax.f32 %v412, 0.0
        %v444 = vmax.f32 %v415, 0.0
        %v445 = vmax.f32 %v418, 0.0
        %v446 = vmax.f32 %v421, 0.0
        %v447 = vmax.f32 %v424, 0.0
        %v448 = vmax.f32 %v427, 0.0
        %v449 = vmax.f32 %v430, 0.0
        %v450 = vmax.f32 %v433, 0.0
        %v451 = vld [vmem:[%s3] sm:$0xff]
        %v452 = vld [vmem:[%s3 + $0x8] sm:$0xff]
        %v453 = vld [vmem:[%s3 + $0x10] sm:$0xff]
        %v454 = vld [vmem:[%s3 + $0x18] sm:$0xff]
        %v455 = vld [vmem:[%s3 + $0x20] sm:$0xff]
        %v456 = vld [vmem:[%s3 + $0x28] sm:$0xff]
        %v457 = vld [vmem:[%s3 + $0x30] sm:$0xff]
        %v458 = vld [vmem:[%s3 + $0x38] sm:$0xff]
        %v459 = vld [vmem:[%s3 + $0x40] sm:$0xff]
        %v460 = vld [vmem:[%s3 + $0x48] sm:$0xff]
        %v461 = vld [vmem:[%s3 + $0x50] sm:$0xff]
        %v462 = vld [vmem:[%s3 + $0x58] sm:$0xff]
        %v463 = vld [vmem:[%s4] sm:$0x7]
        %v465 = vperm.slane %v463, 0
        %v466 = vperm.slane %v463, 1
        %v467 = vperm.slane %v463, 2
        %vm471 = vcmask 261120
        %v473 = vsel %vm471, %v435, 0
        %v476 = vsel %vm471, %v436, 0
        %v479 = vsel %vm471, %v437, 0
        %v482 = vsel %vm471, %v438, 0
        %v485 = vsel %vm471, %v439, 0
        %v488 = vsel %vm471, %v440, 0
        %v491 = vsel %vm471, %v441, 0
        %v494 = vsel %vm471, %v442, 0
        %v497 = vsel %vm471, %v443, 0
        %v500 = vsel %vm471, %v444, 0
        %v503 = vsel %vm471, %v445, 0
        %v506 = vsel %vm471, %v446, 0
        %v509 = vsel %vm471, %v447, 0
        %v512 = vsel %vm471, %v448, 0
        %v515 = vsel %vm471, %v449, 0
        %v518 = vsel %vm471, %v450, 0
        %520 = vmatpush.msra.mxu0 0.0
        %521 = vmatpush.msra.mxu0 0.0
        %522 = vmatpush.msra.mxu0 0.0
        %523 = vmatpush.msra.mxu0 0.0
        %524 = vmatpush.msra.mxu0 0.0
        %525 = vmatpush.msra.mxu0 0.0
        %526 = vmatpush.msra.mxu0 0.0
        %527 = vmatpush.msra.mxu0 0.0
        %528 = vmatpush.msra.mxu0 0.0
        %529 = vmatpush.msra.mxu0 0.0
        %530 = vmatpush.msra.mxu0 0.0
        %531 = vmatpush.msra.mxu0 0.0
        %532 = vmatpush.msra.mxu0 %v460
        %533 = vmatpush.msra.mxu0 %v457
        %534 = vmatpush.msra.mxu0 %v454
        %535 = vmatpush.msra.mxu0 %v451
        %536 = vmatmul.f32.gmra.mxu0 %v473
        %v537 = vpop.f32.mrf.mxu0
        %v538 = vadd.f32 %v465, %v537
        %539 = vmatmul.f32.gmra.mxu0 %v476
        %v540 = vpop.f32.mrf.mxu0
        %v541 = vadd.f32 %v465, %v540
        %542 = vmatmul.f32.gmra.mxu0 %v479
        %v543 = vpop.f32.mrf.mxu0
        %v544 = vadd.f32 %v465, %v543
        %545 = vmatmul.f32.gmra.mxu0 %v482
        %v546 = vpop.f32.mrf.mxu0
        %v547 = vadd.f32 %v465, %v546
        %548 = vmatmul.f32.gmra.mxu0 %v485
        %v549 = vpop.f32.mrf.mxu0
        %v550 = vadd.f32 %v465, %v549
        %551 = vmatmul.f32.gmra.mxu0 %v488
        %v552 = vpop.f32.mrf.mxu0
        %v553 = vadd.f32 %v465, %v552
        %554 = vmatmul.f32.gmra.mxu0 %v491
        %v555 = vpop.f32.mrf.mxu0
        %v556 = vadd.f32 %v465, %v555
        %557 = vmatmul.f32.gmra.mxu0 %v494
        %v558 = vpop.f32.mrf.mxu0
        %v559 = vadd.f32 %v465, %v558
        %560 = vmatmul.f32.gmra.mxu0 %v497
        %v561 = vpop.f32.mrf.mxu0
        %v562 = vadd.f32 %v465, %v561
        %563 = vmatmul.f32.gmra.mxu0 %v500
        %v564 = vpop.f32.mrf.mxu0
        %v565 = vadd.f32 %v465, %v564
        %566 = vmatmul.f32.gmra.mxu0 %v503
        %v567 = vpop.f32.mrf.mxu0
        %v568 = vadd.f32 %v465, %v567
        %569 = vmatmul.f32.gmra.mxu0 %v506
        %v570 = vpop.f32.mrf.mxu0
        %v571 = vadd.f32 %v465, %v570
        %572 = vmatmul.f32.gmra.mxu0 %v509
        %v573 = vpop.f32.mrf.mxu0
        %v574 = vadd.f32 %v465, %v573
        %575 = vmatmul.f32.gmra.mxu0 %v512
        %v576 = vpop.f32.mrf.mxu0
        %v577 = vadd.f32 %v465, %v576
        %578 = vmatmul.f32.gmra.mxu0 %v515
        %v579 = vpop.f32.mrf.mxu0
        %v580 = vadd.f32 %v465, %v579
        %581 = vmatmul.f32.gmra.mxu0 %v518
        %v582 = vpop.f32.mrf.mxu0
        %v583 = vadd.f32 %v465, %v582
        %584 = vdwg.mxu0
        %585 = vmatpush.msra.mxu0 0.0
        %586 = vmatpush.msra.mxu0 0.0
        %587 = vmatpush.msra.mxu0 0.0
        %588 = vmatpush.msra.mxu0 0.0
        %589 = vmatpush.msra.mxu0 0.0
        %590 = vmatpush.msra.mxu0 0.0
        %591 = vmatpush.msra.mxu0 0.0
        %592 = vmatpush.msra.mxu0 0.0
        %593 = vmatpush.msra.mxu0 0.0
        %594 = vmatpush.msra.mxu0 0.0
        %595 = vmatpush.msra.mxu0 0.0
        %596 = vmatpush.msra.mxu0 0.0
        %597 = vmatpush.msra.mxu0 %v461
        %598 = vmatpush.msra.mxu0 %v458
        %599 = vmatpush.msra.mxu0 %v455
        %600 = vmatpush.msra.mxu0 %v452
        %601 = vmatmul.f32.gmra.mxu0 %v473
        %v602 = vpop.f32.mrf.mxu0
        %v603 = vadd.f32 %v466, %v602
        %604 = vmatmul.f32.gmra.mxu0 %v476
        %v605 = vpop.f32.mrf.mxu0
        %v606 = vadd.f32 %v466, %v605
        %607 = vmatmul.f32.gmra.mxu0 %v479
        %v608 = vpop.f32.mrf.mxu0
        %v609 = vadd.f32 %v466, %v608
        %610 = vmatmul.f32.gmra.mxu0 %v482
        %v611 = vpop.f32.mrf.mxu0
        %v612 = vadd.f32 %v466, %v611
        %613 = vmatmul.f32.gmra.mxu0 %v485
        %v614 = vpop.f32.mrf.mxu0
        %v615 = vadd.f32 %v466, %v614
        %616 = vmatmul.f32.gmra.mxu0 %v488
        %v617 = vpop.f32.mrf.mxu0
        %v618 = vadd.f32 %v466, %v617
        %619 = vmatmul.f32.gmra.mxu0 %v491
        %v620 = vpop.f32.mrf.mxu0
        %v621 = vadd.f32 %v466, %v620
        %622 = vmatmul.f32.gmra.mxu0 %v494
        %v623 = vpop.f32.mrf.mxu0
        %v624 = vadd.f32 %v466, %v623
        %625 = vmatmul.f32.gmra.mxu0 %v497
        %v626 = vpop.f32.mrf.mxu0
        %v627 = vadd.f32 %v466, %v626
        %628 = vmatmul.f32.gmra.mxu0 %v500
        %v629 = vpop.f32.mrf.mxu0
        %v630 = vadd.f32 %v466, %v629
        %631 = vmatmul.f32.gmra.mxu0 %v503
        %v632 = vpop.f32.mrf.mxu0
        %v633 = vadd.f32 %v466, %v632
        %634 = vmatmul.f32.gmra.mxu0 %v506
        %v635 = vpop.f32.mrf.mxu0
        %v636 = vadd.f32 %v466, %v635
        %637 = vmatmul.f32.gmra.mxu0 %v509
        %v638 = vpop.f32.mrf.mxu0
        %v639 = vadd.f32 %v466, %v638
        %640 = vmatmul.f32.gmra.mxu0 %v512
        %v641 = vpop.f32.mrf.mxu0
        %v642 = vadd.f32 %v466, %v641
        %643 = vmatmul.f32.gmra.mxu0 %v515
        %v644 = vpop.f32.mrf.mxu0
        %v645 = vadd.f32 %v466, %v644
        %646 = vmatmul.f32.gmra.mxu0 %v518
        %v647 = vpop.f32.mrf.mxu0
        %v648 = vadd.f32 %v466, %v647
        %649 = vdwg.mxu0
        %650 = vmatpush.msra.mxu0 0.0
        %651 = vmatpush.msra.mxu0 0.0
        %652 = vmatpush.msra.mxu0 0.0
        %653 = vmatpush.msra.mxu0 0.0
        %654 = vmatpush.msra.mxu0 0.0
        %655 = vmatpush.msra.mxu0 0.0
        %656 = vmatpush.msra.mxu0 0.0
        %657 = vmatpush.msra.mxu0 0.0
        %658 = vmatpush.msra.mxu0 0.0
        %659 = vmatpush.msra.mxu0 0.0
        %660 = vmatpush.msra.mxu0 0.0
        %661 = vmatpush.msra.mxu0 0.0
        %662 = vmatpush.msra.mxu0 %v462
        %663 = vmatpush.msra.mxu0 %v459
        %664 = vmatpush.msra.mxu0 %v456
        %665 = vmatpush.msra.mxu0 %v453
        %666 = vmatmul.f32.gmra.mxu0 %v473
        %v667 = vpop.f32.mrf.mxu0
        %v668 = vadd.f32 %v467, %v667
        %669 = vmatmul.f32.gmra.mxu0 %v476
        %v670 = vpop.f32.mrf.mxu0
        %v671 = vadd.f32 %v467, %v670
        %672 = vmatmul.f32.gmra.mxu0 %v479
        %v673 = vpop.f32.mrf.mxu0
        %v674 = vadd.f32 %v467, %v673
        %675 = vmatmul.f32.gmra.mxu0 %v482
        %v676 = vpop.f32.mrf.mxu0
        %v677 = vadd.f32 %v467, %v676
        %678 = vmatmul.f32.gmra.mxu0 %v485
        %v679 = vpop.f32.mrf.mxu0
        %v680 = vadd.f32 %v467, %v679
        %681 = vmatmul.f32.gmra.mxu0 %v488
        %v682 = vpop.f32.mrf.mxu0
        %v683 = vadd.f32 %v467, %v682
        %684 = vmatmul.f32.gmra.mxu0 %v491
        %v685 = vpop.f32.mrf.mxu0
        %v686 = vadd.f32 %v467, %v685
        %687 = vmatmul.f32.gmra.mxu0 %v494
        %v688 = vpop.f32.mrf.mxu0
        %v689 = vadd.f32 %v467, %v688
        %690 = vmatmul.f32.gmra.mxu0 %v497
        %v691 = vpop.f32.mrf.mxu0
        %v692 = vadd.f32 %v467, %v691
        %693 = vmatmul.f32.gmra.mxu0 %v500
        %v694 = vpop.f32.mrf.mxu0
        %v695 = vadd.f32 %v467, %v694
        %696 = vmatmul.f32.gmra.mxu0 %v503
        %v697 = vpop.f32.mrf.mxu0
        %v698 = vadd.f32 %v467, %v697
        %699 = vmatmul.f32.gmra.mxu0 %v506
        %v700 = vpop.f32.mrf.mxu0
        %v701 = vadd.f32 %v467, %v700
        %702 = vmatmul.f32.gmra.mxu0 %v509
        %v703 = vpop.f32.mrf.mxu0
        %v704 = vadd.f32 %v467, %v703
        %705 = vmatmul.f32.gmra.mxu0 %v512
        %v706 = vpop.f32.mrf.mxu0
        %v707 = vadd.f32 %v467, %v706
        %708 = vmatmul.f32.gmra.mxu0 %v515
        %v709 = vpop.f32.mrf.mxu0
        %v710 = vadd.f32 %v467, %v709
        %711 = vmatmul.f32.gmra.mxu0 %v518
        %v712 = vpop.f32.mrf.mxu0
        %v713 = vadd.f32 %v467, %v712
        %714 = vdwg.mxu0
        %715 = vst [vmem:[%s276] sm:$0xff] %v538
        %716 = vst [vmem:[%s276 + $0x8] sm:$0xff] %v541
        %717 = vst [vmem:[%s276 + $0x10] sm:$0xff] %v544
        %718 = vst [vmem:[%s276 + $0x18] sm:$0xff] %v547
        %719 = vst [vmem:[%s276 + $0x20] sm:$0xff] %v550
        %720 = vst [vmem:[%s276 + $0x28] sm:$0xff] %v553
        %721 = vst [vmem:[%s276 + $0x30] sm:$0xff] %v556
        %722 = vst [vmem:[%s276 + $0x38] sm:$0xff] %v559
        %723 = vst [vmem:[%s276 + $0x40] sm:$0xff] %v562
        %724 = vst [vmem:[%s276 + $0x48] sm:$0xff] %v565
        %725 = vst [vmem:[%s276 + $0x50] sm:$0xff] %v568
        %726 = vst [vmem:[%s276 + $0x58] sm:$0xff] %v571
        %727 = vst [vmem:[%s276 + $0x60] sm:$0xff] %v574
        %728 = vst [vmem:[%s276 + $0x68] sm:$0xff] %v577
        %729 = vst [vmem:[%s276 + $0x70] sm:$0xff] %v580
        %730 = vst [vmem:[%s276 + $0x78] sm:$0xff] %v583
        %731 = vst [vmem:[%s283] sm:$0xff] %v603
        %732 = vst [vmem:[%s283 + $0x8] sm:$0xff] %v606
        %733 = vst [vmem:[%s283 + $0x10] sm:$0xff] %v609
        %734 = vst [vmem:[%s283 + $0x18] sm:$0xff] %v612
        %735 = vst [vmem:[%s283 + $0x20] sm:$0xff] %v615
        %736 = vst [vmem:[%s283 + $0x28] sm:$0xff] %v618
        %737 = vst [vmem:[%s283 + $0x30] sm:$0xff] %v621
        %738 = vst [vmem:[%s283 + $0x38] sm:$0xff] %v624
        %739 = vst [vmem:[%s283 + $0x40] sm:$0xff] %v627
        %740 = vst [vmem:[%s283 + $0x48] sm:$0xff] %v630
        %741 = vst [vmem:[%s283 + $0x50] sm:$0xff] %v633
        %742 = vst [vmem:[%s283 + $0x58] sm:$0xff] %v636
        %743 = vst [vmem:[%s283 + $0x60] sm:$0xff] %v639
        %744 = vst [vmem:[%s283 + $0x68] sm:$0xff] %v642
        %745 = vst [vmem:[%s283 + $0x70] sm:$0xff] %v645
        %746 = vst [vmem:[%s283 + $0x78] sm:$0xff] %v648
        %747 = vst [vmem:[%s290] sm:$0xff] %v668
        %748 = vst [vmem:[%s290 + $0x8] sm:$0xff] %v671
        %749 = vst [vmem:[%s290 + $0x10] sm:$0xff] %v674
        %750 = vst [vmem:[%s290 + $0x18] sm:$0xff] %v677
        %751 = vst [vmem:[%s290 + $0x20] sm:$0xff] %v680
        %752 = vst [vmem:[%s290 + $0x28] sm:$0xff] %v683
        %753 = vst [vmem:[%s290 + $0x30] sm:$0xff] %v686
        %754 = vst [vmem:[%s290 + $0x38] sm:$0xff] %v689
        %755 = vst [vmem:[%s290 + $0x40] sm:$0xff] %v692
        %756 = vst [vmem:[%s290 + $0x48] sm:$0xff] %v695
        %757 = vst [vmem:[%s290 + $0x50] sm:$0xff] %v698
        %758 = vst [vmem:[%s290 + $0x58] sm:$0xff] %v701
        %759 = vst [vmem:[%s290 + $0x60] sm:$0xff] %v704
        %760 = vst [vmem:[%s290 + $0x68] sm:$0xff] %v707
        %761 = vst [vmem:[%s290 + $0x70] sm:$0xff] %v710
        %762 = vst [vmem:[%s290 + $0x78] sm:$0xff] %v713
        %s763 = sand.u32 %s143, 1
        %s764 = scalar_lea.sflag [#allocation3], %s763
        %s765 = sand.u32 %s143, 1
        %s766 = smul.addr %s765, 128
        %s767 = scalar_lea.vmem [#allocation2], %s766
        %s768 = sand.u32 %s25, 1
        %s769 = scalar_lea.sflag [#allocation5], %s768
        %s770 = sand.u32 %s169, 1
        %s771 = smul.addr %s770, 128
        %s772 = scalar_lea.vmem [#allocation4], %s771
        %s773 = sand.u32 %s25, 1
        %s774 = scalar_lea.sflag [#allocation5], %s773
        %s775 = sand.u32 %s195, 1
        %s776 = smul.addr %s775, 128
        %s777 = scalar_lea.vmem [#allocation6], %s776
        // Predicated region
        $region41: #{tpu_custom_call.1} parent=39 // pred_check
          %p778 = pneg %p153
        $region42: #{tpu_custom_call.1} parent=39 // pred_check_branch
          %780 = sbr.rel (%p778) target = $region44
        $region43: #{tpu_custom_call.1} parent=39 // pred_region
          %s781 = smul.u32 16, %s25
          %783 = vsyncadd %s764, 0
          %s784 = smul.addr %s781, 8
          %s785 = scalar_lea.hbm %s5, %s784
          %s786 = sshll.u32 %s767, 4
          %s787 = int_to_ptr.vmem [resolvable:$true] %s786
          %s788 = sshll.u32 %s785, 4
          %s789 = int_to_ptr.hbm [resolvable:$true] %s788
          %794 = dma.vmem_to_hbm [thread:$0]  %s787, 2048, %s789, %s764, 128, 128, 8
        $region44: #{tpu_custom_call.1} parent=39 // pred_fallthru
          _
        // Predicated region
        $region45: #{tpu_custom_call.1} parent=39 // pred_check
          %p795 = pneg %p179
        $region46: #{tpu_custom_call.1} parent=39 // pred_check_branch
          %797 = sbr.rel (%p795) target = $region48
        $region47: #{tpu_custom_call.1} parent=39 // pred_region
          %s798 = smul.u32 16, %s25
          %800 = vsyncadd %s769, 0
          %s801 = smul.addr %s798, 8
          %s802 = scalar_lea.hbm %s6, %s801
          %s803 = sshll.u32 %s772, 4
          %s804 = int_to_ptr.vmem [resolvable:$true] %s803
          %s805 = sshll.u32 %s802, 4
          %s806 = int_to_ptr.hbm [resolvable:$true] %s805
          %811 = dma.vmem_to_hbm [thread:$0]  %s804, 2048, %s806, %s769, 128, 128, 8
        $region48: #{tpu_custom_call.1} parent=39 // pred_fallthru
          _
        // Predicated region
        $region49: #{tpu_custom_call.1} parent=39 // pred_check
          %p812 = pneg %p205
        $region50: #{tpu_custom_call.1} parent=39 // pred_check_branch
          %814 = sbr.rel (%p812) target = $region52
        $region51: #{tpu_custom_call.1} parent=39 // pred_region
          %s815 = smul.u32 16, %s25
          %817 = vsyncadd %s774, 0
          %s818 = smul.addr %s815, 8
          %s819 = scalar_lea.hbm %s7, %s818
          %s820 = sshll.u32 %s777, 4
          %s821 = int_to_ptr.vmem [resolvable:$true] %s820
          %s822 = sshll.u32 %s819, 4
          %s823 = int_to_ptr.hbm [resolvable:$true] %s822
          %828 = dma.vmem_to_hbm [thread:$0]  %s821, 2048, %s823, %s774, 128, 128, 8
        $region52: #{tpu_custom_call.1} parent=39 // pred_fallthru
          _
      $region40: #{tpu_custom_call.1} parent=5 // pred_fallthru
        _
      %p829 = scmp.le.s32.totalorder 2, %s20
      // Predicated region
      $region53: #{tpu_custom_call.1} parent=5 // pred_check
        %p830 = pneg %p829
      $region54: #{tpu_custom_call.1} parent=5 // pred_check_branch
        %832 = sbr.rel (%p830) target = $region56
      $region55: #{tpu_custom_call.1} parent=5 // pred_region
        %s833 = ssub.s32 %s20, 2
        // Predicated region
        $region57: #{tpu_custom_call.1} parent=55 // pred_check
          %p834 = pneg %p159
        $region58: #{tpu_custom_call.1} parent=55 // pred_check_branch
          %836 = sbr.rel (%p834) target = $region60
        $region59: #{tpu_custom_call.1} parent=55 // pred_region
          %s837 = sand.u32 %s144, 1
          %s838 = scalar_lea.sflag [#allocation3], %s837
          %s839 = sand.u32 %s144, 1
          %s840 = smul.addr %s839, 128
          %s841 = scalar_lea.vmem [#allocation2], %s840
          %843 = dma.done %s838, 2048
        $region60: #{tpu_custom_call.1} parent=55 // pred_fallthru
          _
        // Predicated region
        $region61: #{tpu_custom_call.1} parent=55 // pred_check
          %p844 = pneg %p185
        $region62: #{tpu_custom_call.1} parent=55 // pred_check_branch
          %846 = sbr.rel (%p844) target = $region64
        $region63: #{tpu_custom_call.1} parent=55 // pred_region
          %s847 = sand.u32 %s26, 1
          %s848 = scalar_lea.sflag [#allocation5], %s847
          %s849 = sand.u32 %s170, 1
          %s850 = smul.addr %s849, 128
          %s851 = scalar_lea.vmem [#allocation4], %s850
          %853 = dma.done %s848, 2048
        $region64: #{tpu_custom_call.1} parent=55 // pred_fallthru
          _
        // Predicated region
        $region65: #{tpu_custom_call.1} parent=55 // pred_check
          %p854 = pneg %p211
        $region66: #{tpu_custom_call.1} parent=55 // pred_check_branch
          %856 = sbr.rel (%p854) target = $region68
        $region67: #{tpu_custom_call.1} parent=55 // pred_region
          %s857 = sand.u32 %s26, 1
          %s858 = scalar_lea.sflag [#allocation5], %s857
          %s859 = sand.u32 %s196, 1
          %s860 = smul.addr %s859, 128
          %s861 = scalar_lea.vmem [#allocation6], %s860
          %863 = dma.done %s858, 2048
        $region68: #{tpu_custom_call.1} parent=55 // pred_fallthru
          _
      $region56: #{tpu_custom_call.1} parent=5 // pred_fallthru
        _
    $region6: #{tpu_custom_call.1} parent=1 // loop_footer
      %s24 = sadd.s32 1, %s20
    $region7: #{tpu_custom_call.1} parent=1 // loop_footer_branch
      %19 = sbr.rel target = $region3
    $region8: #{tpu_custom_call.1} parent=1 // loop_exit
      _
    %864 = vsyncpa [#allocation3], 1
    %s865 = scalar_lea.sflag [#allocation3], 1
    %866 = vsyncpa %s865, 1
    %867 = vsyncpa [#allocation5], 1
    %s868 = scalar_lea.sflag [#allocation5], 1
    %869 = vsyncpa %s868, 1

</llo_original>
